<compile_context>
chip_gen: v5e
topology: v5e:2x2
jax: 0.10.0
libtpu: 0.0.40
codegen_flags: <defaults>
</compile_context>

<pallas_src>
import math

import jax
import jax.numpy as jnp
from jax.experimental import pallas as pl
from jax.experimental.pallas import tpu as pltpu

_LANES = 128
_TILE_TARGET_BYTES = 8 << 20      # ~8 MiB per pipeline buffer
_SINGLE_BLOCK_BYTES = 1 << 20     # below this: one full-array block, no grid
_VMEM_LIMIT_BYTES = 48 << 20      # 4 x 8 MiB buffers + headroom; fits v7x 64 MiB


def _identity_kernel(x_ref, o_ref):
    o_ref[...] = x_ref[...]


def _round_up(n, m):
    return ((n + m - 1) // m) * m


def pallas_identity(x, *, donate=False):
    """Identity forward: returns an array equal to x, streamed through Pallas."""
    shape, dtype = x.shape, x.dtype
    total = math.prod(shape)
    if total == 0:
        return x

    itemsize = jnp.dtype(dtype).itemsize

    # Lane-dense flat view; pad to a multiple of 128 lanes when needed so every
    # store is a full-lane unmasked vst and the tiled path stays available.
    padded_total = _round_up(total, _LANES)
    flat = x.reshape(total)
    if padded_total != total:
        flat = jnp.pad(flat, (0, padded_total - total))
    rows = padded_total // _LANES
    x2 = flat.reshape(rows, _LANES)

    row_bytes = _LANES * itemsize
    total_bytes = rows * row_bytes
    io_aliases = {0: 0} if donate else {}

    if total_bytes <= _SINGLE_BLOCK_BYTES:
        # One full-array block: block dims == array dims (exempt from the
        # (8,128) rule), no grid, no per-step overhead.
        out = pl.pallas_call(
            _identity_kernel,
            out_shape=jax.ShapeDtypeStruct((rows, _LANES), dtype),
            input_output_aliases=io_aliases,
        )(x2)
    else:
        # dtype-aware tile sizing: ~8 MiB per buffer, rows a multiple of 8.
        tile_rows = max(8, (_TILE_TARGET_BYTES // row_bytes) // 8 * 8)
        # Guarantee at least 2 grid steps so the "parallel" axis can shard the
        # copy across both TensorCores on v7x for mid-sized inputs.
        tile_rows = min(tile_rows, max(8, _round_up((rows + 1) // 2, 8)))
        grid = (pl.cdiv(rows, tile_rows),)
        out = pl.pallas_call(
            _identity_kernel,
            out_shape=jax.ShapeDtypeStruct((rows, _LANES), dtype),
            grid=grid,
            in_specs=[pl.BlockSpec((tile_rows, _LANES), lambda i: (i, 0))],
            out_specs=pl.BlockSpec((tile_rows, _LANES), lambda i: (i, 0)),
            input_output_aliases=io_aliases,
            compiler_params=pltpu.CompilerParams(
                dimension_semantics=("parallel",),
                vmem_limit_bytes=_VMEM_LIMIT_BYTES,
            ),
        )(x2)

    if padded_total != total:
        out = out.reshape(padded_total)[:total]
    return out.reshape(shape)


@jax.jit
def identity_forward(x):
    """Equivalent of Identity.forward(x) in the PyTorch module (jit'ed so the
    reshape/pad plumbing fuses around the pallas_call)."""
    return pallas_identity(x)


if __name__ == "__main__":
    key = jax.random.PRNGKey(0)
    k0, k1, k2, k3 = jax.random.split(key, 4)

    # Small shape consistent with the module: batch=2, channels=4, spatial=16.
    x = jax.random.normal(k0, (2, 4, 16, 16), jnp.float32)
    out = jax.block_until_ready(identity_forward(x))
    assert out.shape == x.shape and out.dtype == x.dtype, (out.shape, out.dtype)
    assert jnp.array_equal(out, x)

    # Gridded path with a bf16 input (dtype-scaled tiles, 2 grid steps).
    x_bf16 = jax.random.normal(k1, (4096, 160), jnp.float32).astype(jnp.bfloat16)
    out_bf16 = jax.block_until_ready(identity_forward(x_bf16))
    assert out_bf16.shape == x_bf16.shape and out_bf16.dtype == x_bf16.dtype
    assert jnp.array_equal(out_bf16, x_bf16)

    # Full-size-tile gridded path (16 MiB f32 -> two 8 MiB tiles).
    x_big = jax.random.normal(k2, (8192, 512), jnp.float32)
    out_big = jax.block_until_ready(identity_forward(x_big))
    assert out_big.shape == x_big.shape and out_big.dtype == x_big.dtype
    assert jnp.array_equal(out_big, x_big)

    # Non-%128 total (pad-and-slice path).
    x_odd = jax.random.normal(k3, (7, 13, 11), jnp.float32)
    out_odd = jax.block_until_ready(identity_forward(x_odd))
    assert out_odd.shape == x_odd.shape and out_odd.dtype == x_odd.dtype
    assert jnp.array_equal(out_odd, x_odd)

    print("KERNEL_OK")
</pallas_src>

<mosaic_0001>
module attributes {stable_mosaic.version = 11 : i64} {
  func.func @_identity_kernel(%arg0: memref<16x128xf32, #tpu.memory_space<vmem>>, %arg1: memref<16x128xf32, #tpu.memory_space<vmem>>) attributes {dimension_semantics = [], scalar_prefetch = 0 : i64, scratch_operands = 0 : i64, tpu.core_type = #tpu.core_type<tc>} {
    %c0 = arith.constant 0 : index
    %c0_0 = arith.constant 0 : index
    %0 = vector.load %arg0[%c0, %c0_0] : memref<16x128xf32, #tpu.memory_space<vmem>>, vector<16x128xf32>
    %c0_1 = arith.constant 0 : index
    %c0_2 = arith.constant 0 : index
    %1 = vector.load %arg1[%c0_1, %c0_2] : memref<16x128xf32, #tpu.memory_space<vmem>>, vector<16x128xf32>
    tpu.vector_store %arg1[%c0_1, %c0_2], %0 {strides = array<i32>} : memref<16x128xf32, #tpu.memory_space<vmem>>, vector<16x128xf32>,
    return
  }
}

</mosaic_0001>

<llo_original>
// kernel: identity_forward.1
$region0: #{identity_forward.1}
  #allocation0 [shape = 'u32[]', space=smem, size = 0x4, offset = 0x4, fixed_abs, tag = 'smem constant byte address 0x4 - core index']
  #allocation1 [shape = 'u32[72,128]{1,0:T(1,128)}', space=vmem, size = 0x9000, scoped, tag = 'internal scratch']
  %s0 = inlined_call_operand.vmem [shape: f32[16,128], index: 0, kind: input, shape index: {}]
  %s1 = inlined_call_operand.vmem [shape: f32[16,128], index: 1, kind: output, shape index: {}]
  %s2 = sld [smem:[#allocation0]]
  $region14: #{identity_forward.1} parent=0
    _
  %s4 = ssub.s32 1, %s2
  %s5 = scalar_select 0, %s4, %s2
  // Predicated region
  $region2: #{identity_forward.1} parent=0 // pred_check
    _
  $region3: #{identity_forward.1} parent=0 // pred_check_branch
    %7 = sbr.rel (0) target = $region5
  $region4: #{identity_forward.1} parent=0 // pred_region
    _
  $region5: #{identity_forward.1} parent=0 // pred_fallthru
    _
  %v8 = vld [vmem:[%s0] sm:$0xff]
  %v9 = vld [vmem:[%s0 + $0x8] sm:$0xff]
  %10 = vst [vmem:[%s1] sm:$0xff] %v8
  %11 = vst [vmem:[%s1 + $0x8] sm:$0xff] %v9
  // Predicated region
  $region6: #{identity_forward.1} parent=0 // pred_check
    _
  $region7: #{identity_forward.1} parent=0 // pred_check_branch
    %13 = sbr.rel (0) target = $region9
  $region8: #{identity_forward.1} parent=0 // pred_region
    _
  $region9: #{identity_forward.1} parent=0 // pred_fallthru
    _
  // Predicated region
  $region10: #{identity_forward.1} parent=0 // pred_check
    _
  $region11: #{identity_forward.1} parent=0 // pred_check_branch
    %15 = sbr.rel (0) target = $region13
  $region12: #{identity_forward.1} parent=0 // pred_region
    _
  $region13: #{identity_forward.1} parent=0 // pred_fallthru
    _

</llo_original>
